<compile_context>
chip_gen: v7x
topology: tpu7x:2x2x1
jax: 0.10.0
libtpu: 0.0.40
codegen_flags: <defaults>
</compile_context>

<pallas_src>
import jax
import jax.numpy as jnp
from jax.experimental import pallas as pl
from jax.experimental.pallas import tpu as pltpu

# ----- model configuration (small, deterministic, self-contained) -----
HIDDEN_SIZE   = 32   # __C.HIDDEN_SIZE
FLAT_MLP_SIZE = 64   # __C.FLAT_MLP_SIZE
FLAT_GLIMPSES = 2    # __C.FLAT_GLIMPSES
FLAT_OUT_SIZE = 64   # __C.FLAT_OUT_SIZE
OUT_PAD       = 128  # lane-dense padded output / aux width (sliced back to 64 outside)

B = 2   # batch
S = 8   # sequence length


def attflat_kernel(x_ref, aux_ref, w1_ref, w2_ref, wm_ref, out_ref):
    """Single invocation, whole batch resident in VMEM.

    x_ref   : (B, Sp, H)          f32   (Sp = S padded to a multiple of 8)
    aux_ref : (B + 2, OUT_PAD)    f32   row 0: b1 (first M cols)
                                        row 1: bm (padded to OUT_PAD)
                                        rows 2..2+B: additive mask bias (first Sp cols)
    w1_ref  : (H, M)              bf16
    w2_ref  : (M, G)              bf16
    wm_ref  : (G, H, OUT_PAD)     bf16  (linear_merge weight, per-glimpse, zero-padded cols)
    out_ref : (B, OUT_PAD)        f32
    """
    Bn, Sn, Hn = x_ref.shape
    M = w1_ref.shape[1]
    G = w2_ref.shape[1]

    x = x_ref[...]                                      # (B, Sp, H) f32
    x2 = x.reshape(Bn * Sn, Hn).astype(w1_ref.dtype)    # (B*Sp, H) bf16 for MXU

    # ---- carve the packed aux buffer (static slices -> cheap views) ----
    b1   = aux_ref[0:1, 0:M]                            # (1, M)  f32
    bm   = aux_ref[1:2, :]                              # (1, OUT_PAD) f32
    bias = aux_ref[2:2 + Bn, 0:Sn]                      # (B, Sp) f32 additive mask (0 / -1e9)

    # ---- MLP: Linear -> ReLU -> Linear (dropout identity; b2 dropped:
    #      softmax over S is shift-invariant to a per-glimpse constant) ----
    h = jnp.dot(x2, w1_ref[...], preferred_element_type=jnp.float32) + b1
    h = jnp.maximum(h, 0.0)                             # (B*Sp, M) f32
    logits = jnp.dot(h.astype(w2_ref.dtype), w2_ref[...],
                     preferred_element_type=jnp.float32)            # (B*Sp, G)

    # ---- additive mask + softmax over the sequence axis (per batch, f32) ----
    att = logits.reshape(Bn, Sn, G) + bias[:, :, None]  # (B, Sp, G)
    att = att - jnp.max(att, axis=1, keepdims=True)
    e = jnp.exp(att)
    att = e * pl.reciprocal(jnp.sum(e, axis=1, keepdims=True), approx=True)

    # ---- glimpse-weighted sums over S on the MXU (no transpose, no concat) ----
    x_atted = jnp.einsum('bsg,bsh->bgh', att, x,
                         preferred_element_type=jnp.float32)        # (B, G, H)

    # ---- linear_merge: accumulate per-glimpse dots (lane-dense padded output) ----
    merged = bm + jnp.dot(x_atted[:, 0, :].astype(wm_ref.dtype), wm_ref[0],
                          preferred_element_type=jnp.float32)
    for g in range(1, G):
        merged = merged + jnp.dot(x_atted[:, g, :].astype(wm_ref.dtype), wm_ref[g],
                                  preferred_element_type=jnp.float32)
    out_ref[...] = merged.astype(out_ref.dtype)         # (B, OUT_PAD)


def prepare_params(params):
    """One-time weight prep (bf16 cast, lane padding, per-glimpse reshape).

    Hoisted out of the per-call path so no convert/pad XLA kernels run before
    every launch.
    """
    w1, b1, w2, b2, wm, bm = params   # b2 intentionally unused (softmax shift-invariance)
    del b2
    w1b = w1.astype(jnp.bfloat16)
    w2b = w2.astype(jnp.bfloat16)
    # linear_merge weight (G*H, OUT) -> (G, H, OUT_PAD), zero-padded output cols.
    wm_g = wm.reshape(FLAT_GLIMPSES, HIDDEN_SIZE, FLAT_OUT_SIZE)
    wm_g = jnp.pad(wm_g, ((0, 0), (0, 0), (0, OUT_PAD - FLAT_OUT_SIZE))).astype(jnp.bfloat16)
    # constant rows of the packed aux buffer: row 0 = b1, row 1 = bm (both padded to OUT_PAD)
    b1_row = jnp.pad(b1.astype(jnp.float32), ((0, 0), (0, OUT_PAD - b1.shape[1])))
    bm_row = jnp.pad(bm.astype(jnp.float32), ((0, 0), (0, OUT_PAD - bm.shape[1])))
    aux_const = jnp.concatenate([b1_row, bm_row], axis=0)            # (2, OUT_PAD)
    return (w1b, w2b, wm_g, aux_const)


def att_flat(x, x_mask, prepped):
    """x: (B, S, H) float32, x_mask: (B, 1, 1, S) bool (True = masked)."""
    w1b, w2b, wm_g, aux_const = prepped
    Bn, Sn, Hn = x.shape

    # mask -> additive bias (0 / -1e9); valid while |logits| << 1e9 (weights ~0.05 scale).
    bias = jnp.where(x_mask.reshape(Bn, Sn), jnp.float32(-1e9), jnp.float32(0.0))

    # Pad S to a multiple of 8 so in-kernel reshapes stay sublane-tile aligned.
    Sp = ((Sn + 7) // 8) * 8
    assert Sp <= OUT_PAD, "sequence length must fit in one aux row"
    if Sp != Sn:
        x = jnp.pad(x, ((0, 0), (0, Sp - Sn), (0, 0)))
        bias = jnp.pad(bias, ((0, 0), (0, Sp - Sn)), constant_values=-1e9)

    # Pack the per-call mask bias into the aux buffer alongside b1 / bm.
    bias_rows = jnp.pad(bias, ((0, 0), (0, OUT_PAD - Sp)))            # (B, OUT_PAD)
    aux = jnp.concatenate([aux_const, bias_rows], axis=0)             # (B+2, OUT_PAD)

    vmem = pl.BlockSpec(memory_space=pltpu.MemorySpace.VMEM)
    out_pad = pl.pallas_call(
        attflat_kernel,
        out_shape=jax.ShapeDtypeStruct((Bn, OUT_PAD), jnp.float32),
        in_specs=[vmem] * 5,
        out_specs=vmem,
    )(x, aux, w1b, w2b, wm_g)
    return out_pad[:, :FLAT_OUT_SIZE]


def att_flat_reference(x, x_mask, params):
    """Plain-JAX f32 reference mirroring the PyTorch forward (including b2)."""
    w1, b1, w2, b2, wm, bm = params
    h = jnp.maximum(x @ w1 + b1, 0.0)
    att = h @ w2 + b2                                          # (B, S, G)
    m = x_mask.reshape(x.shape[0], x.shape[1], 1)
    att = jnp.where(m, -1e9, att)
    att = jax.nn.softmax(att, axis=1)
    att_list = [jnp.sum(att[:, :, i:i + 1] * x, axis=1) for i in range(FLAT_GLIMPSES)]
    x_atted = jnp.concatenate(att_list, axis=1)                # (B, G*H)
    return x_atted @ wm + bm


def init_params(key):
    k1, k2, k3, k4, k5, k6 = jax.random.split(key, 6)
    w1 = jax.random.normal(k1, (HIDDEN_SIZE, FLAT_MLP_SIZE), jnp.float32) * 0.05
    b1 = jax.random.normal(k2, (1, FLAT_MLP_SIZE), jnp.float32) * 0.05
    w2 = jax.random.normal(k3, (FLAT_MLP_SIZE, FLAT_GLIMPSES), jnp.float32) * 0.05
    b2 = jax.random.normal(k4, (1, FLAT_GLIMPSES), jnp.float32) * 0.05
    # nn.Linear(H*G, OUT) weight is (OUT, IN); store transposed as (IN, OUT).
    wm = jax.random.normal(k5, (HIDDEN_SIZE * FLAT_GLIMPSES, FLAT_OUT_SIZE), jnp.float32) * 0.05
    bm = jax.random.normal(k6, (1, FLAT_OUT_SIZE), jnp.float32) * 0.05
    return (w1, b1, w2, b2, wm, bm)


if __name__ == "__main__":
    key = jax.random.PRNGKey(0)
    kx, kp = jax.random.split(key)
    params = init_params(kp)
    prepped = prepare_params(params)      # one-time: bf16 cast / pad / reshape

    x = jax.random.normal(kx, (B, S, HIDDEN_SIZE), jnp.float32)
    # mask out the last 2 positions of batch 0 and the last 3 of batch 1
    lens = jnp.array([S - 2, S - 3])
    pos = jnp.arange(S)
    x_mask = (pos[None, :] >= lens[:, None]).reshape(B, 1, 1, S)  # True = masked

    att_flat_jit = jax.jit(att_flat)
    out = att_flat_jit(x, x_mask, prepped)
    out = jax.block_until_ready(out)

    ref = att_flat_reference(x, x_mask, params)
    assert out.shape == (B, FLAT_OUT_SIZE)
    # bf16 MXU weight feeds + approx reciprocal -> small rounding vs. f32 reference
    assert jnp.allclose(out, ref, atol=2e-2, rtol=2e-2)

    print("KERNEL_OK")
</pallas_src>

<mosaic_0001>
module attributes {stable_mosaic.version = 11 : i64} {
  func.func @attflat_kernel(%arg0: memref<2x8x32xf32, #tpu.memory_space<vmem>>, %arg1: memref<4x128xf32, #tpu.memory_space<vmem>>, %arg2: memref<32x64xbf16, #tpu.memory_space<vmem>>, %arg3: memref<64x2xbf16, #tpu.memory_space<vmem>>, %arg4: memref<2x32x128xbf16, #tpu.memory_space<vmem>>, %arg5: memref<2x128xf32, #tpu.memory_space<vmem>>) attributes {dimension_semantics = [], scalar_prefetch = 0 : i64, scratch_operands = 0 : i64, tpu.core_type = #tpu.core_type<tc>} {
    %c0 = arith.constant 0 : index
    %c0_0 = arith.constant 0 : index
    %c0_1 = arith.constant 0 : index
    %0 = vector.load %arg0[%c0, %c0_0, %c0_1] : memref<2x8x32xf32, #tpu.memory_space<vmem>>, vector<2x8x32xf32>
    %1 = vector.shape_cast %0 : vector<2x8x32xf32> to vector<16x32xf32>
    %2 = arith.truncf %1 : vector<16x32xf32> to vector<16x32xbf16>
    %c0_2 = arith.constant 0 : index
    %c0_3 = arith.constant 0 : index
    %3 = vector.load %arg1[%c0_2, %c0_3] : memref<4x128xf32, #tpu.memory_space<vmem>>, vector<1x64xf32>
    %c1 = arith.constant 1 : index
    %c0_4 = arith.constant 0 : index
    %4 = vector.load %arg1[%c1, %c0_4] : memref<4x128xf32, #tpu.memory_space<vmem>>, vector<1x128xf32>
    %c2 = arith.constant 2 : index
    %c0_5 = arith.constant 0 : index
    %5 = vector.load %arg1[%c2, %c0_5] : memref<4x128xf32, #tpu.memory_space<vmem>>, vector<2x8xf32>
    %c0_6 = arith.constant 0 : index
    %c0_7 = arith.constant 0 : index
    %6 = vector.load %arg2[%c0_6, %c0_7] : memref<32x64xbf16, #tpu.memory_space<vmem>>, vector<32x64xbf16>
    %cst = arith.constant dense<0.000000e+00> : vector<16x64xf32>
    %7 = tpu.matmul %2, %6, %cst {dimension_numbers = #tpu.dot_dimension_numbers<[1], [0], [0], [1], [0, 0, 1, 1], [], []>} : vector<16x32xbf16>, vector<32x64xbf16>, vector<16x64xf32> -> vector<16x64xf32>
    %8 = vector.broadcast %3 : vector<1x64xf32> to vector<16x64xf32>
    %9 = arith.addf %7, %8 : vector<16x64xf32>
    %cst_8 = arith.constant 0.000000e+00 : f32
    %10 = vector.broadcast %cst_8 : f32 to vector<16x64xf32>
    %11 = arith.maximumf %9, %10 : vector<16x64xf32>
    %12 = arith.truncf %11 : vector<16x64xf32> to vector<16x64xbf16>
    %c0_9 = arith.constant 0 : index
    %c0_10 = arith.constant 0 : index
    %13 = vector.load %arg3[%c0_9, %c0_10] : memref<64x2xbf16, #tpu.memory_space<vmem>>, vector<64x2xbf16>
    %cst_11 = arith.constant dense<0.000000e+00> : vector<16x2xf32>
    %14 = tpu.matmul %12, %13, %cst_11 {dimension_numbers = #tpu.dot_dimension_numbers<[1], [0], [0], [1], [0, 0, 1, 1], [], []>} : vector<16x64xbf16>, vector<64x2xbf16>, vector<16x2xf32> -> vector<16x2xf32>
    %15 = vector.shape_cast %14 : vector<16x2xf32> to vector<2x8x2xf32>
    %16 = vector.shape_cast %5 : vector<2x8xf32> to vector<2x8x1xf32>
    %17 = vector.broadcast %16 : vector<2x8x1xf32> to vector<2x8x2xf32>
    %18 = arith.addf %15, %17 : vector<2x8x2xf32>
    %cst_12 = arith.constant dense<0xFF800000> : vector<2x2xf32>
    %19 = vector.multi_reduction <maximumf>, %18, %cst_12 [1] : vector<2x8x2xf32> to vector<2x2xf32>
    %20 = vector.shape_cast %19 : vector<2x2xf32> to vector<2x1x2xf32>
    %21 = vector.broadcast %20 : vector<2x1x2xf32> to vector<2x8x2xf32>
    %22 = arith.subf %18, %21 : vector<2x8x2xf32>
    %23 = math.exp %22 : vector<2x8x2xf32>
    %cst_13 = arith.constant dense<0.000000e+00> : vector<2x2xf32>
    %24 = vector.multi_reduction <add>, %23, %cst_13 [1] : vector<2x8x2xf32> to vector<2x2xf32>
    %25 = vector.shape_cast %24 : vector<2x2xf32> to vector<2x1x2xf32>
    %26 = tpu.reciprocal %25 {approx = true} : vector<2x1x2xf32> -> vector<2x1x2xf32>
    %27 = vector.broadcast %26 : vector<2x1x2xf32> to vector<2x8x2xf32>
    %28 = arith.mulf %23, %27 : vector<2x8x2xf32>
    "tpu.trace_start"() <{level = 10 : i32, message = "bsg,bsh->bgh"}> : () -> ()
    %cst_14 = arith.constant dense<0.000000e+00> : vector<2x2x32xf32>
    %29 = tpu.matmul %28, %0, %cst_14 {dimension_numbers = #tpu.dot_dimension_numbers<[1], [1], [2], [2], [0, 0, 0, 2, 1, 2], [0], [0]>} : vector<2x8x2xf32>, vector<2x8x32xf32>, vector<2x2x32xf32> -> vector<2x2x32xf32>
    "tpu.trace_stop"() : () -> ()
    %30 = vector.extract_strided_slice %29 {offsets = [0, 0, 0], sizes = [2, 1, 32], strides = [1, 1, 1]} : vector<2x2x32xf32> to vector<2x1x32xf32>
    %31 = vector.shape_cast %30 : vector<2x1x32xf32> to vector<2x32xf32>
    %32 = arith.truncf %31 : vector<2x32xf32> to vector<2x32xbf16>
    %c0_15 = arith.constant 0 : index
    %c0_16 = arith.constant 0 : index
    %c0_17 = arith.constant 0 : index
    %33 = vector.load %arg4[%c0_15, %c0_16, %c0_17] : memref<2x32x128xbf16, #tpu.memory_space<vmem>>, vector<1x32x128xbf16>
    %34 = vector.shape_cast %33 : vector<1x32x128xbf16> to vector<32x128xbf16>
    %cst_18 = arith.constant dense<0.000000e+00> : vector<2x128xf32>
    %35 = tpu.matmul %32, %34, %cst_18 {dimension_numbers = #tpu.dot_dimension_numbers<[1], [0], [0], [1], [0, 0, 1, 1], [], []>} : vector<2x32xbf16>, vector<32x128xbf16>, vector<2x128xf32> -> vector<2x128xf32>
    %36 = vector.broadcast %4 : vector<1x128xf32> to vector<2x128xf32>
    %37 = arith.addf %36, %35 : vector<2x128xf32>
    %38 = vector.extract_strided_slice %29 {offsets = [0, 1, 0], sizes = [2, 1, 32], strides = [1, 1, 1]} : vector<2x2x32xf32> to vector<2x1x32xf32>
    %39 = vector.shape_cast %38 : vector<2x1x32xf32> to vector<2x32xf32>
    %40 = arith.truncf %39 : vector<2x32xf32> to vector<2x32xbf16>
    %c1_19 = arith.constant 1 : index
    %c0_20 = arith.constant 0 : index
    %c0_21 = arith.constant 0 : index
    %41 = vector.load %arg4[%c1_19, %c0_20, %c0_21] : memref<2x32x128xbf16, #tpu.memory_space<vmem>>, vector<1x32x128xbf16>
    %42 = vector.shape_cast %41 : vector<1x32x128xbf16> to vector<32x128xbf16>
    %cst_22 = arith.constant dense<0.000000e+00> : vector<2x128xf32>
    %43 = tpu.matmul %40, %42, %cst_22 {dimension_numbers = #tpu.dot_dimension_numbers<[1], [0], [0], [1], [0, 0, 1, 1], [], []>} : vector<2x32xbf16>, vector<32x128xbf16>, vector<2x128xf32> -> vector<2x128xf32>
    %44 = arith.addf %37, %43 : vector<2x128xf32>
    %c0_23 = arith.constant 0 : index
    %c0_24 = arith.constant 0 : index
    %45 = vector.load %arg5[%c0_23, %c0_24] : memref<2x128xf32, #tpu.memory_space<vmem>>, vector<2x128xf32>
    tpu.vector_store %arg5[%c0_23, %c0_24], %44 {strides = array<i32>} : memref<2x128xf32, #tpu.memory_space<vmem>>, vector<2x128xf32>,
    return
  }
}

</mosaic_0001>

<llo_original>
// kernel: att_flat.1
$region0: #{att_flat.1}
  #allocation0 [shape = 'u32[]', space=smem, size = 0x4, offset = 0x4, fixed_abs, tag = 'smem constant byte address 0x4 - core index']
  #allocation1 [shape = 'u32[144,128]{1,0:T(1,128)}', space=vmem, size = 0x12000, scoped, tag = 'internal scratch']
  %s0 = inlined_call_operand.vmem [shape: f32[2,8,32], index: 0, kind: input, shape index: {}]
  %s1 = inlined_call_operand.vmem [shape: f32[4,128], index: 1, kind: input, shape index: {}]
  %s2 = inlined_call_operand.hbm [shape: bf16[32,64], index: 2, kind: input, shape index: {}]
  %s3 = inlined_call_operand.vmem [shape: bf16[64,2], index: 3, kind: input, shape index: {}]
  %s4 = inlined_call_operand.vmem [shape: bf16[2,32,128], index: 4, kind: input, shape index: {}]
  %s5 = inlined_call_operand.hbm [shape: f32[2,128], index: 5, kind: output, shape index: {}]
  %s6 = sld [smem:[#allocation0]]
  $region34: #{att_flat.1} parent=0
    _
  %s8 = ssub.s32 1, %s6
  %s9 = scalar_select 0, %s8, %s6
  $region1: #{att_flat.1} parent=0
    #allocation2 [shape = 'u8[8192]{0}', space=vmem, size = 0x2000, scoped, tag = 'input window, operand 2, single buffered']
    #allocation3 [shape = 's32[1]{0}', space=sflag, size = 0x4, scoped, tag = 'scoped memory for att_flat.1']
    #allocation4 [shape = 's32[1]{0}', space=sflag, size = 0x4, scoped, tag = 'scoped memory for att_flat.1']
    #allocation5 [shape = 'u8[1024]{0}', space=vmem, size = 0x400, scoped, tag = 'output window, operand 0, single buffered']
    %10 = vsyncpa [#allocation3], 0
    %11 = vsyncpa [#allocation4], 0
    // Predicated region
    $region2: #{att_flat.1} parent=1 // pred_check
      _
    $region3: #{att_flat.1} parent=1 // pred_check_branch
      %13 = sbr.rel (0) target = $region5
    $region4: #{att_flat.1} parent=1 // pred_region
      _
    $region5: #{att_flat.1} parent=1 // pred_fallthru
      _
    // Predicated region
    $region6: #{att_flat.1} parent=1 // pred_check
      _
    $region7: #{att_flat.1} parent=1 // pred_check_branch
      %15 = sbr.rel (0) target = $region9
    $region8: #{att_flat.1} parent=1 // pred_region
      _
    $region9: #{att_flat.1} parent=1 // pred_fallthru
      _
    // Predicated region
    $region10: #{att_flat.1} parent=1 // pred_check
      _
    $region11: #{att_flat.1} parent=1 // pred_check_branch
      %17 = sbr.rel (0) target = $region13
    $region12: #{att_flat.1} parent=1 // pred_region
      %s19 = ssub.s32 256, 256
      %20 = vsyncadd [#allocation3], %s19
      %s21 = sshll.u32 [#allocation2], 4
      %s22 = int_to_ptr.vmem [resolvable:$true] %s21
      %27 = dma.hbm_to_vmem [thread:$0]  %s2, 256, %s22, [#allocation3], 64, 64, 4
    $region13: #{att_flat.1} parent=1 // pred_fallthru
      _
    // Predicated region
    $region14: #{att_flat.1} parent=1 // pred_check
      _
    $region15: #{att_flat.1} parent=1 // pred_check_branch
      %29 = sbr.rel (0) target = $region17
    $region16: #{att_flat.1} parent=1 // pred_region
      _
    $region17: #{att_flat.1} parent=1 // pred_fallthru
      _
    // Predicated region
    $region18: #{att_flat.1} parent=1 // pred_check
      _
    $region19: #{att_flat.1} parent=1 // pred_check_branch
      %31 = sbr.rel (0) target = $region21
    $region20: #{att_flat.1} parent=1 // pred_region
      _
    $region21: #{att_flat.1} parent=1 // pred_fallthru
      _
    // Predicated region
    $region22: #{att_flat.1} parent=1 // pred_check
      _
    $region23: #{att_flat.1} parent=1 // pred_check_branch
      %33 = sbr.rel (0) target = $region25
    $region24: #{att_flat.1} parent=1 // pred_region
      %34 = dma.done [#allocation3], 256
    $region25: #{att_flat.1} parent=1 // pred_fallthru
      _
    %v36 = vld [vmem:[%s0] sm:$0xff]
    %v37 = vld [vmem:[%s0 + $0x8] sm:$0xff]
    %v38 = vpack.c.bf16 %v37, %v36
    %v39 = vld [vmem:[%s1] sm:$0x1]
    %v40 = vld [vmem:[%s1 + $0x1] sm:$0x1]
    %v41 = vld [vmem:[%s1 + $0x2] sm:$0x3]
    %v42 = vld [vmem:[#allocation2] sm:$0xf]
    %v43 = vld [vmem:[#allocation2 + $0x4] sm:$0xf]
    %v44 = vld [vmem:[#allocation2 + $0x8] sm:$0xf]
    %v45 = vld [vmem:[#allocation2 + $0xc] sm:$0xf]
    %v46 = vlaneseq
    %v47 = vshrl.u32 %v46, 7
    %v48 = vsub.s32 0, %v47
    %v49 = vrot.slane %v39, %v48
    %v54 = vunpack.c.l.b16 %v42
    %v55 = vunpack.c.l.b16 %v43
    %v56 = vunpack.c.l.b16 %v44
    %v57 = vunpack.c.l.b16 %v45
    %v58 = vpack.c.b16 %v55, %v54
    %v59 = vpack.c.b16 %v57, %v56
    %vm62 = vcmask 261120
    %v64 = vsel %vm62, %v38, 0
    %66 = vmatprep.subr.bf16.mxu0 0
    %67 = vmatpush1.bf16.msra.mxu0 %v58
    %68 = vmatprep.subr.bf16.mxu0 0
    %69 = vmatpush1.bf16.msra.mxu0 %v59
    %70 = vmatprep.subr.bf16.mxu0 0
    %71 = vmatpush1.bf16.msra.mxu0 0
    %72 = vmatprep.subr.bf16.mxu0 0
    %73 = vmatpush1.bf16.msra.mxu0 0
    %74 = vmatprep.subr.bf16.mxu0 0
    %75 = vmatpush1.bf16.msra.mxu0 0
    %76 = vmatprep.subr.bf16.mxu0 0
    %77 = vmatpush1.bf16.msra.mxu0 0
    %78 = vmatprep.subr.bf16.mxu0 0
    %79 = vmatpush1.bf16.msra.mxu0 0
    %80 = vmatprep.subr.bf16.mxu0 0
    %81 = vmatpush1.bf16.msra.mxu0 0
    %82 = vmatprep.subr.bf16.mxu0 0
    %83 = vmatpush1.bf16.msra.mxu0 0
    %84 = vmatprep.subr.bf16.mxu0 0
    %85 = vmatpush1.bf16.msra.mxu0 0
    %86 = vmatprep.subr.bf16.mxu0 0
    %87 = vmatpush1.bf16.msra.mxu0 0
    %88 = vmatprep.subr.bf16.mxu0 0
    %89 = vmatpush1.bf16.msra.mxu0 0
    %90 = vmatprep.subr.bf16.mxu0 0
    %91 = vmatpush1.bf16.msra.mxu0 0
    %92 = vmatprep.subr.bf16.mxu0 0
    %93 = vmatpush1.bf16.msra.mxu0 0
    %94 = vmatprep.subr.bf16.mxu0 0
    %95 = vmatpush1.bf16.msra.mxu0 0
    %96 = vmatprep.subr.bf16.mxu0 0
    %97 = vmatpush1.bf16.msra.mxu0 0
    %98 = vmatprep.mubr.bf16.mxu0 0
    %99 = vmatmul.mubr.bf16.gmra.mrb[0].mxu0 %v64
    %v100 = vpop.f32.mrb[0].mxu0
    %v101 = vadd.f32 %v49, %v100
    %v102 = vpop.f32.mrb[0].mxu0
    %v103 = vpop.f32.mrb[0].mxu0
    %v104 = vadd.f32 %v49, %v103
    %v105 = vpop.f32.mrb[0].mxu0
    %106 = vdwg.mxu0
    %v107 = vmax.f32 %v101, 0.0
    %v108 = vmax.f32 %v104, 0.0
    %v109 = vpack.c.bf16 %v108, %v107
    %v110 = vld [vmem:[%s3] sm:$0xf]
    %v111 = vld [vmem:[%s3 + $0x4] sm:$0xf]
    %v112 = vld [vmem:[%s3 + $0x8] sm:$0xf]
    %v113 = vld [vmem:[%s3 + $0xc] sm:$0xf]
    %v114 = vld [vmem:[%s3 + $0x10] sm:$0xf]
    %v115 = vld [vmem:[%s3 + $0x14] sm:$0xf]
    %v116 = vld [vmem:[%s3 + $0x18] sm:$0xf]
    %v117 = vld [vmem:[%s3 + $0x1c] sm:$0xf]
    %v126 = vunpack.c.l.b16 %v110
    %v127 = vunpack.c.l.b16 %v111
    %v128 = vunpack.c.l.b16 %v112
    %v129 = vunpack.c.l.b16 %v113
    %v130 = vunpack.c.l.b16 %v114
    %v131 = vunpack.c.l.b16 %v115
    %v132 = vunpack.c.l.b16 %v116
    %v133 = vunpack.c.l.b16 %v117
    %v134 = vpack.c.b16 %v127, %v126
    %v135 = vpack.c.b16 %v129, %v128
    %v136 = vpack.c.b16 %v131, %v130
    %v137 = vpack.c.b16 %v133, %v132
    %vm142 = vcmask 523264
    %v144 = vsel %vm142, %v109, 0
    %146 = vmatprep.subr.bf16.mxu0 0
    %147 = vmatpush1.bf16.msra.mxu0 %v134
    %148 = vmatprep.subr.bf16.mxu0 0
    %149 = vmatpush1.bf16.msra.mxu0 %v135
    %150 = vmatprep.subr.bf16.mxu0 0
    %151 = vmatpush1.bf16.msra.mxu0 %v136
    %152 = vmatprep.subr.bf16.mxu0 0
    %153 = vmatpush1.bf16.msra.mxu0 %v137
    %154 = vmatprep.subr.bf16.mxu0 0
    %155 = vmatpush1.bf16.msra.mxu0 0
    %156 = vmatprep.subr.bf16.mxu0 0
    %157 = vmatpush1.bf16.msra.mxu0 0
    %158 = vmatprep.subr.bf16.mxu0 0
    %159 = vmatpush1.bf16.msra.mxu0 0
    %160 = vmatprep.subr.bf16.mxu0 0
    %161 = vmatpush1.bf16.msra.mxu0 0
    %162 = vmatprep.subr.bf16.mxu0 0
    %163 = vmatpush1.bf16.msra.mxu0 0
    %164 = vmatprep.subr.bf16.mxu0 0
    %165 = vmatpush1.bf16.msra.mxu0 0
    %166 = vmatprep.subr.bf16.mxu0 0
    %167 = vmatpush1.bf16.msra.mxu0 0
    %168 = vmatprep.subr.bf16.mxu0 0
    %169 = vmatpush1.bf16.msra.mxu0 0
    %170 = vmatprep.subr.bf16.mxu0 0
    %171 = vmatpush1.bf16.msra.mxu0 0
    %172 = vmatprep.subr.bf16.mxu0 0
    %173 = vmatpush1.bf16.msra.mxu0 0
    %174 = vmatprep.subr.bf16.mxu0 0
    %175 = vmatpush1.bf16.msra.mxu0 0
    %176 = vmatprep.subr.bf16.mxu0 0
    %177 = vmatpush1.bf16.msra.mxu0 0
    %178 = vmatprep.mubr.bf16.mxu0 0
    %179 = vmatmul.mubr.bf16.gmra.mrb[0].mxu0 %v144
    %v180 = vpop.f32.mrb[0].mxu0
    %v181 = vadd.f32 0.0, %v180
    %v182 = vpop.f32.mrb[0].mxu0
    %v183 = vpop.f32.mrb[0].mxu0
    %v184 = vadd.f32 0.0, %v183
    %v185 = vpop.f32.mrb[0].mxu0
    %186 = vdwg.mxu0
    %v187 = vlaneseq
    %v188 = vshrl.u32 %v187, 7
    %v189 = vsub.s32 0, %v188
    %v190 = vrot.slane %v41, %v189
    %192 = vbcast.lane.b32.xlu0 %v190, 256
    %v193 = vpop.permute.xlu0 %192
    %v194 = vlaneseq
    %v195 = vshrl.u32 %v194, 7
    %v196 = vsub.s32 1, %v195
    %v197 = vrot.slane %v41, %v196
    %199 = vbcast.lane.b32.xlu0 %v197, 256
    %v200 = vpop.permute.xlu0 %199
    %v201 = vadd.f32 %v181, %v193
    %v202 = vadd.f32 %v184, %v200
    %vm203 = vcmask 15360
    %v204 = vsel %vm203, %v201, -inf
    %v205 = vrot.slane %v204, 4
    %v206 = vmax.f32 %v204, %v205
    %v207 = vrot.slane %v206, 2
    %v208 = vmax.f32 %v206, %v207
    %v209 = vrot.slane %v208, 1
    %v210 = vmax.f32 %v208, %v209
    %v211 = vsel %vm203, %v202, -inf
    %v212 = vrot.slane %v211, 4
    %v213 = vmax.f32 %v211, %v212
    %v214 = vrot.slane %v213, 2
    %v215 = vmax.f32 %v213, %v214
    %v216 = vrot.slane %v215, 1
    %v217 = vmax.f32 %v215, %v216
    %v218 = vsub.f32 %v201, %v210
    %v219 = vsub.f32 %v202, %v217
    %v220 = vmul.f32 %v218, 1.442695
    %v221 = vpow.pop %v220
    %v222 = vmul.f32 %v219, 1.442695
    %v223 = vpow.pop %v222
    %v224 = vsel %vm203, %v221, 0.0
    %v225 = vrot.slane %v224, 4
    %v226 = vadd.f32 %v224, %v225
    %v227 = vrot.slane %v226, 2
    %v228 = vadd.f32 %v226, %v227
    %v229 = vrot.slane %v228, 1
    %v230 = vadd.f32 %v228, %v229
    %v231 = vsel %vm203, %v223, 0.0
    %v232 = vrot.slane %v231, 4
    %v233 = vadd.f32 %v231, %v232
    %v234 = vrot.slane %v233, 2
    %v235 = vadd.f32 %v233, %v234
    %v236 = vrot.slane %v235, 1
    %v237 = vadd.f32 %v235, %v236
    %v238 = vrcp.pop %v230
    %v239 = vrcp.pop %v237
    %v240 = vmul.f32 %v221, %v238
    %v241 = vmul.f32 %v223, %v239
    %242 = vxpose.xlu0.b32.start [1/16] %v240, 128
    %243 = vxpose.xlu0.b32.cont [2/16] 0.0, 128
    %244 = vxpose.xlu0.b32.cont [3/16] 0.0, 128
    %245 = vxpose.xlu0.b32.cont [4/16] 0.0, 128
    %246 = vxpose.xlu0.b32.cont [5/16] 0.0, 128
    %247 = vxpose.xlu0.b32.cont [6/16] 0.0, 128
    %248 = vxpose.xlu0.b32.cont [7/16] 0.0, 128
    %249 = vxpose.xlu0.b32.cont [8/16] 0.0, 128
    %250 = vxpose.xlu0.b32.cont [9/16] 0.0, 128
    %251 = vxpose.xlu0.b32.cont [10/16] 0.0, 128
    %252 = vxpose.xlu0.b32.cont [11/16] 0.0, 128
    %253 = vxpose.xlu0.b32.cont [12/16] 0.0, 128
    %254 = vxpose.xlu0.b32.cont [13/16] 0.0, 128
    %255 = vxpose.xlu0.b32.cont [14/16] 0.0, 128
    %256 = vxpose.xlu0.b32.cont [15/16] 0.0, 128
    %257 = vxpose.xlu0.b32.end [16/16] 0.0, 128
    %v258 = vpop.trf.xlu0
    %v259 = vpop.trf.xlu0
    %v260 = vpop.trf.xlu0
    %v261 = vpop.trf.xlu0
    %v262 = vpop.trf.xlu0
    %v263 = vpop.trf.xlu0
    %v264 = vpop.trf.xlu0
    %v265 = vpop.trf.xlu0
    %v266 = vpop.trf.xlu0
    %v267 = vpop.trf.xlu0
    %v268 = vpop.trf.xlu0
    %v269 = vpop.trf.xlu0
    %v270 = vpop.trf.xlu0
    %v271 = vpop.trf.xlu0
    %v272 = vpop.trf.xlu0
    %v273 = vpop.trf.xlu0
    %vm274 = vcmask 64512
    %v276 = vsel %vm274, %v258, 0
    %278 = vmatprep.subr.mxu0 0.0
    %279 = vmatpush1.msra.mxu0 %v36
    %280 = vmatprep.subr.mxu0 0.0
    %281 = vmatpush1.msra.mxu0 0.0
    %282 = vmatprep.subr.mxu0 0.0
    %283 = vmatpush1.msra.mxu0 0.0
    %284 = vmatprep.subr.mxu0 0.0
    %285 = vmatpush1.msra.mxu0 0.0
    %286 = vmatprep.subr.mxu0 0.0
    %287 = vmatpush1.msra.mxu0 0.0
    %288 = vmatprep.subr.mxu0 0.0
    %289 = vmatpush1.msra.mxu0 0.0
    %290 = vmatprep.subr.mxu0 0.0
    %291 = vmatpush1.msra.mxu0 0.0
    %292 = vmatprep.subr.mxu0 0.0
    %293 = vmatpush1.msra.mxu0 0.0
    %294 = vmatprep.subr.mxu0 0.0
    %295 = vmatpush1.msra.mxu0 0.0
    %296 = vmatprep.subr.mxu0 0.0
    %297 = vmatpush1.msra.mxu0 0.0
    %298 = vmatprep.subr.mxu0 0.0
    %299 = vmatpush1.msra.mxu0 0.0
    %300 = vmatprep.subr.mxu0 0.0
    %301 = vmatpush1.msra.mxu0 0.0
    %302 = vmatprep.subr.mxu0 0.0
    %303 = vmatpush1.msra.mxu0 0.0
    %304 = vmatprep.subr.mxu0 0.0
    %305 = vmatpush1.msra.mxu0 0.0
    %306 = vmatprep.subr.mxu0 0.0
    %307 = vmatpush1.msra.mxu0 0.0
    %308 = vmatprep.subr.mxu0 0.0
    %309 = vmatpush1.msra.mxu0 0.0
    %310 = vmatprep.subr.mxu0 0.0
    %311 = vmatpush1.msra.mxu0 0.0
    %312 = vmatprep.subr.mxu0 0.0
    %313 = vmatpush1.msra.mxu0 0.0
    %314 = vmatprep.subr.mxu0 0.0
    %315 = vmatpush1.msra.mxu0 0.0
    %316 = vmatprep.subr.mxu0 0.0
    %317 = vmatpush1.msra.mxu0 0.0
    %318 = vmatprep.subr.mxu0 0.0
    %319 = vmatpush1.msra.mxu0 0.0
    %320 = vmatprep.subr.mxu0 0.0
    %321 = vmatpush1.msra.mxu0 0.0
    %322 = vmatprep.subr.mxu0 0.0
    %323 = vmatpush1.msra.mxu0 0.0
    %324 = vmatprep.subr.mxu0 0.0
    %325 = vmatpush1.msra.mxu0 0.0
    %326 = vmatprep.subr.mxu0 0.0
    %327 = vmatpush1.msra.mxu0 0.0
    %328 = vmatprep.subr.mxu0 0.0
    %329 = vmatpush1.msra.mxu0 0.0
    %330 = vmatprep.subr.mxu0 0.0
    %331 = vmatpush1.msra.mxu0 0.0
    %332 = vmatprep.subr.mxu0 0.0
    %333 = vmatpush1.msra.mxu0 0.0
    %334 = vmatprep.subr.mxu0 0.0
    %335 = vmatpush1.msra.mxu0 0.0
    %336 = vmatprep.subr.mxu0 0.0
    %337 = vmatpush1.msra.mxu0 0.0
    %338 = vmatprep.subr.mxu0 0.0
    %339 = vmatpush1.msra.mxu0 0.0
    %340 = vmatprep.subr.mxu0 0.0
    %341 = vmatpush1.msra.mxu0 0.0
    %342 = vmatprep.mubr.f32.mxu0 0.0
    %343 = vmatmul.mubr.f32.gmra.mrb[0].mxu0 %v276
    %v344 = vpop.f32.mrb[0].mxu0
    %v345 = vadd.f32 0.0, %v344
    %v346 = vpop.f32.mrb[0].mxu0
    %347 = vdwg.mxu0
    %348 = vxpose.xlu0.b32.start [1/16] %v241, 128
    %349 = vxpose.xlu0.b32.cont [2/16] 0.0, 128
    %350 = vxpose.xlu0.b32.cont [3/16] 0.0, 128
    %351 = vxpose.xlu0.b32.cont [4/16] 0.0, 128
    %352 = vxpose.xlu0.b32.cont [5/16] 0.0, 128
    %353 = vxpose.xlu0.b32.cont [6/16] 0.0, 128
    %354 = vxpose.xlu0.b32.cont [7/16] 0.0, 128
    %355 = vxpose.xlu0.b32.cont [8/16] 0.0, 128
    %356 = vxpose.xlu0.b32.cont [9/16] 0.0, 128
    %357 = vxpose.xlu0.b32.cont [10/16] 0.0, 128
    %358 = vxpose.xlu0.b32.cont [11/16] 0.0, 128
    %359 = vxpose.xlu0.b32.cont [12/16] 0.0, 128
    %360 = vxpose.xlu0.b32.cont [13/16] 0.0, 128
    %361 = vxpose.xlu0.b32.cont [14/16] 0.0, 128
    %362 = vxpose.xlu0.b32.cont [15/16] 0.0, 128
    %363 = vxpose.xlu0.b32.end [16/16] 0.0, 128
    %v364 = vpop.trf.xlu0
    %v365 = vpop.trf.xlu0
    %v366 = vpop.trf.xlu0
    %v367 = vpop.trf.xlu0
    %v368 = vpop.trf.xlu0
    %v369 = vpop.trf.xlu0
    %v370 = vpop.trf.xlu0
    %v371 = vpop.trf.xlu0
    %v372 = vpop.trf.xlu0
    %v373 = vpop.trf.xlu0
    %v374 = vpop.trf.xlu0
    %v375 = vpop.trf.xlu0
    %v376 = vpop.trf.xlu0
    %v377 = vpop.trf.xlu0
    %v378 = vpop.trf.xlu0
    %v379 = vpop.trf.xlu0
    %v381 = vsel %vm274, %v364, 0
    %383 = vmatprep.subr.mxu0 0.0
    %384 = vmatpush1.msra.mxu0 %v37
    %385 = vmatprep.subr.mxu0 0.0
    %386 = vmatpush1.msra.mxu0 0.0
    %387 = vmatprep.subr.mxu0 0.0
    %388 = vmatpush1.msra.mxu0 0.0
    %389 = vmatprep.subr.mxu0 0.0
    %390 = vmatpush1.msra.mxu0 0.0
    %391 = vmatprep.subr.mxu0 0.0
    %392 = vmatpush1.msra.mxu0 0.0
    %393 = vmatprep.subr.mxu0 0.0
    %394 = vmatpush1.msra.mxu0 0.0
    %395 = vmatprep.subr.mxu0 0.0
    %396 = vmatpush1.msra.mxu0 0.0
    %397 = vmatprep.subr.mxu0 0.0
    %398 = vmatpush1.msra.mxu0 0.0
    %399 = vmatprep.subr.mxu0 0.0
    %400 = vmatpush1.msra.mxu0 0.0
    %401 = vmatprep.subr.mxu0 0.0
    %402 = vmatpush1.msra.mxu0 0.0
    %403 = vmatprep.subr.mxu0 0.0
    %404 = vmatpush1.msra.mxu0 0.0
    %405 = vmatprep.subr.mxu0 0.0
    %406 = vmatpush1.msra.mxu0 0.0
    %407 = vmatprep.subr.mxu0 0.0
    %408 = vmatpush1.msra.mxu0 0.0
    %409 = vmatprep.subr.mxu0 0.0
    %410 = vmatpush1.msra.mxu0 0.0
    %411 = vmatprep.subr.mxu0 0.0
    %412 = vmatpush1.msra.mxu0 0.0
    %413 = vmatprep.subr.mxu0 0.0
    %414 = vmatpush1.msra.mxu0 0.0
    %415 = vmatprep.subr.mxu0 0.0
    %416 = vmatpush1.msra.mxu0 0.0
    %417 = vmatprep.subr.mxu0 0.0
    %418 = vmatpush1.msra.mxu0 0.0
    %419 = vmatprep.subr.mxu0 0.0
    %420 = vmatpush1.msra.mxu0 0.0
    %421 = vmatprep.subr.mxu0 0.0
    %422 = vmatpush1.msra.mxu0 0.0
    %423 = vmatprep.subr.mxu0 0.0
    %424 = vmatpush1.msra.mxu0 0.0
    %425 = vmatprep.subr.mxu0 0.0
    %426 = vmatpush1.msra.mxu0 0.0
    %427 = vmatprep.subr.mxu0 0.0
    %428 = vmatpush1.msra.mxu0 0.0
    %429 = vmatprep.subr.mxu0 0.0
    %430 = vmatpush1.msra.mxu0 0.0
    %431 = vmatprep.subr.mxu0 0.0
    %432 = vmatpush1.msra.mxu0 0.0
    %433 = vmatprep.subr.mxu0 0.0
    %434 = vmatpush1.msra.mxu0 0.0
    %435 = vmatprep.subr.mxu0 0.0
    %436 = vmatpush1.msra.mxu0 0.0
    %437 = vmatprep.subr.mxu0 0.0
    %438 = vmatpush1.msra.mxu0 0.0
    %439 = vmatprep.subr.mxu0 0.0
    %440 = vmatpush1.msra.mxu0 0.0
    %441 = vmatprep.subr.mxu0 0.0
    %442 = vmatpush1.msra.mxu0 0.0
    %443 = vmatprep.subr.mxu0 0.0
    %444 = vmatpush1.msra.mxu0 0.0
    %445 = vmatprep.subr.mxu0 0.0
    %446 = vmatpush1.msra.mxu0 0.0
    %447 = vmatprep.mubr.f32.mxu0 0.0
    %448 = vmatmul.mubr.f32.gmra.mrb[0].mxu0 %v381
    %v449 = vpop.f32.mrb[0].mxu0
    %v450 = vadd.f32 0.0, %v449
    %v451 = vpop.f32.mrb[0].mxu0
    %452 = vdwg.mxu0
    %v453 = vpack.c.bf16 %v345, %v345
    %v454 = vpack.c.bf16 %v450, %v450
    %v455 = vld [vmem:[%s4] sm:$0xf]
    %v456 = vld [vmem:[%s4 + $0x4] sm:$0xf]
    %v457 = vld [vmem:[%s4 + $0x8] sm:$0xf]
    %v458 = vld [vmem:[%s4 + $0xc] sm:$0xf]
    %v461 = vunpack.c.l.b16 %v453
    %v462 = vunpack.c.l.b16 %v454
    %v463 = vrot.slane %v462, 7
    %vm464 = vcmask 1041409
    %v465 = vsel %vm464, %v463, %v461
    %v466 = vpack.c.b16 %v465, %v465
    %v471 = vunpack.c.l.b16 %v455
    %v472 = vunpack.c.l.b16 %v456
    %v473 = vunpack.c.l.b16 %v457
    %v474 = vunpack.c.l.b16 %v458
    %v475 = vpack.c.b16 %v472, %v471
    %v476 = vpack.c.b16 %v474, %v473
    %v480 = vsel %vm62, %v466, 0
    %482 = vmatprep.subr.bf16.mxu0 0
    %483 = vmatpush1.bf16.msra.mxu0 %v475
    %484 = vmatprep.subr.bf16.mxu0 0
    %485 = vmatpush1.bf16.msra.mxu0 %v476
    %486 = vmatprep.subr.bf16.mxu0 0
    %487 = vmatpush1.bf16.msra.mxu0 0
    %488 = vmatprep.subr.bf16.mxu0 0
    %489 = vmatpush1.bf16.msra.mxu0 0
    %490 = vmatprep.subr.bf16.mxu0 0
    %491 = vmatpush1.bf16.msra.mxu0 0
    %492 = vmatprep.subr.bf16.mxu0 0
    %493 = vmatpush1.bf16.msra.mxu0 0
    %494 = vmatprep.subr.bf16.mxu0 0
    %495 = vmatpush1.bf16.msra.mxu0 0
    %496 = vmatprep.subr.bf16.mxu0 0
    %497 = vmatpush1.bf16.msra.mxu0 0
    %498 = vmatprep.subr.bf16.mxu0 0
    %499 = vmatpush1.bf16.msra.mxu0 0
    %500 = vmatprep.subr.bf16.mxu0 0
    %501 = vmatpush1.bf16.msra.mxu0 0
    %502 = vmatprep.subr.bf16.mxu0 0
    %503 = vmatpush1.bf16.msra.mxu0 0
    %504 = vmatprep.subr.bf16.mxu0 0
    %505 = vmatpush1.bf16.msra.mxu0 0
    %506 = vmatprep.subr.bf16.mxu0 0
    %507 = vmatpush1.bf16.msra.mxu0 0
    %508 = vmatprep.subr.bf16.mxu0 0
    %509 = vmatpush1.bf16.msra.mxu0 0
    %510 = vmatprep.subr.bf16.mxu0 0
    %511 = vmatpush1.bf16.msra.mxu0 0
    %512 = vmatprep.subr.bf16.mxu0 0
    %513 = vmatpush1.bf16.msra.mxu0 0
    %514 = vmatprep.mubr.bf16.mxu0 0
    %515 = vmatmul.mubr.bf16.gmra.mrb[0].mxu0 %v480
    %v516 = vpop.f32.mrb[0].mxu0
    %v517 = vadd.f32 0.0, %v516
    %v518 = vpop.f32.mrb[0].mxu0
    %v519 = vpop.f32.mrb[0].mxu0
    %v520 = vpop.f32.mrb[0].mxu0
    %521 = vdwg.mxu0
    %v522 = vlaneseq
    %v523 = vshrl.u32 %v522, 7
    %v524 = vsub.s32 0, %v523
    %v525 = vrot.slane %v40, %v524
    %v526 = vadd.f32 %v525, %v517
    %s527 = scalar_lea.vmem %s4, 16
    %v528 = vld [vmem:[%s527] sm:$0xf]
    %v529 = vld [vmem:[%s527 + $0x4] sm:$0xf]
    %v530 = vld [vmem:[%s527 + $0x8] sm:$0xf]
    %v531 = vld [vmem:[%s527 + $0xc] sm:$0xf]
    %v532 = vrot.slane %v461, 1
    %v533 = vsel %vm464, %v462, %v532
    %v534 = vpack.c.b16 %v533, %v533
    %v539 = vunpack.c.l.b16 %v528
    %v540 = vunpack.c.l.b16 %v529
    %v541 = vunpack.c.l.b16 %v530
    %v542 = vunpack.c.l.b16 %v531
    %v543 = vpack.c.b16 %v540, %v539
    %v544 = vpack.c.b16 %v542, %v541
    %v548 = vsel %vm62, %v534, 0
    %550 = vmatprep.subr.bf16.mxu0 0
    %551 = vmatpush1.bf16.msra.mxu0 %v543
    %552 = vmatprep.subr.bf16.mxu0 0
    %553 = vmatpush1.bf16.msra.mxu0 %v544
    %554 = vmatprep.subr.bf16.mxu0 0
    %555 = vmatpush1.bf16.msra.mxu0 0
    %556 = vmatprep.subr.bf16.mxu0 0
    %557 = vmatpush1.bf16.msra.mxu0 0
    %558 = vmatprep.subr.bf16.mxu0 0
    %559 = vmatpush1.bf16.msra.mxu0 0
    %560 = vmatprep.subr.bf16.mxu0 0
    %561 = vmatpush1.bf16.msra.mxu0 0
    %562 = vmatprep.subr.bf16.mxu0 0
    %563 = vmatpush1.bf16.msra.mxu0 0
    %564 = vmatprep.subr.bf16.mxu0 0
    %565 = vmatpush1.bf16.msra.mxu0 0
    %566 = vmatprep.subr.bf16.mxu0 0
    %567 = vmatpush1.bf16.msra.mxu0 0
    %568 = vmatprep.subr.bf16.mxu0 0
    %569 = vmatpush1.bf16.msra.mxu0 0
    %570 = vmatprep.subr.bf16.mxu0 0
    %571 = vmatpush1.bf16.msra.mxu0 0
    %572 = vmatprep.subr.bf16.mxu0 0
    %573 = vmatpush1.bf16.msra.mxu0 0
    %574 = vmatprep.subr.bf16.mxu0 0
    %575 = vmatpush1.bf16.msra.mxu0 0
    %576 = vmatprep.subr.bf16.mxu0 0
    %577 = vmatpush1.bf16.msra.mxu0 0
    %578 = vmatprep.subr.bf16.mxu0 0
    %579 = vmatpush1.bf16.msra.mxu0 0
    %580 = vmatprep.subr.bf16.mxu0 0
    %581 = vmatpush1.bf16.msra.mxu0 0
    %582 = vmatprep.mubr.bf16.mxu0 0
    %583 = vmatmul.mubr.bf16.gmra.mrb[0].mxu0 %v548
    %v584 = vpop.f32.mrb[0].mxu0
    %v585 = vadd.f32 0.0, %v584
    %v586 = vpop.f32.mrb[0].mxu0
    %v587 = vpop.f32.mrb[0].mxu0
    %v588 = vpop.f32.mrb[0].mxu0
    %589 = vdwg.mxu0
    %v590 = vadd.f32 %v526, %v585
    %591 = vst [vmem:[#allocation5] sm:$0x3] %v590
    // Predicated region
    $region26: #{att_flat.1} parent=1 // pred_check
      _
    $region27: #{att_flat.1} parent=1 // pred_check_branch
      %593 = sbr.rel (0) target = $region29
    $region28: #{att_flat.1} parent=1 // pred_region
      %s595 = ssub.s32 32, 32
      %596 = vsyncadd [#allocation4], %s595
      %s598 = sshll.u32 [#allocation5], 4
      %s599 = int_to_ptr.vmem [resolvable:$true] %s598
      %601 = dma.vmem_to_hbm [thread:$0]  %s599, 32, %s5, [#allocation4]
    $region29: #{att_flat.1} parent=1 // pred_fallthru
      _
    // Predicated region
    $region30: #{att_flat.1} parent=1 // pred_check
      _
    $region31: #{att_flat.1} parent=1 // pred_check_branch
      %603 = sbr.rel (0) target = $region33
    $region32: #{att_flat.1} parent=1 // pred_region
      %604 = dma.done [#allocation4], 32
    $region33: #{att_flat.1} parent=1 // pred_fallthru
      _
    %605 = vsyncpa [#allocation3], 1
    %606 = vsyncpa [#allocation4], 1

</llo_original>
